<compile_context>
chip_gen: v6e
topology: v6e:2x2x1
jax: 0.10.0
libtpu: 0.0.40
codegen_flags: <defaults>
</compile_context>

<pallas_src>
import jax
import jax.numpy as jnp
from jax.experimental import pallas as pl
from jax.experimental.pallas import tpu as pltpu


def _sage_kernel_concat(self_ref, agg_ref, w_self_ref, w_agg_ref, o_ref):
    # self_ref/agg_ref: (TM, in)   w_*_ref: (in, out_p)   o_ref: (TM, out_p)
    acc = jnp.dot(self_ref[...], w_self_ref[...],
                  preferred_element_type=jnp.float32)
    acc = acc + jnp.dot(agg_ref[...], w_agg_ref[...],
                        preferred_element_type=jnp.float32)
    o_ref[...] = jnp.maximum(acc, 0.0).astype(o_ref.dtype)


def _sage_kernel_gcn(agg_ref, w_ref, o_ref):
    # agg_ref: (TM, in)   w_ref: (in, out_p)   o_ref: (TM, out_p)
    acc = jnp.dot(agg_ref[...], w_ref[...],
                  preferred_element_type=jnp.float32)
    o_ref[...] = jnp.maximum(acc, 0.0).astype(o_ref.dtype)


def _round_up(x, m):
    return ((x + m - 1) // m) * m


def sage_layer(self_feats, aggregate_feats, weight, gcn=False,
               block_rows=512, cast_to_bf16=False):
    """Pallas implementation of SageLayer.forward."""
    n, in_size = aggregate_feats.shape
    out_size, f_total = weight.shape  # f_total = 2*in (or in if gcn)

    # Lane-dense output: pad the output feature dim up to a multiple of 128.
    out_p = _round_up(out_size, 128)

    # Pre-transpose the weight once (f, out) and zero-pad the output columns.
    w_t = weight.T
    if out_p != out_size:
        w_t = jnp.pad(w_t, ((0, 0), (0, out_p - out_size)))

    if cast_to_bf16:
        w_t = w_t.astype(jnp.bfloat16)
        self_feats = self_feats.astype(jnp.bfloat16)
        aggregate_feats = aggregate_feats.astype(jnp.bfloat16)

    # Row tiling: full extent if it fits in one block, otherwise a
    # (8,128)-aligned tile; Pallas masks the final partial block.
    tm = n if n <= block_rows else block_rows
    grid = (pl.cdiv(n, tm),)

    compiler_params = pltpu.CompilerParams(dimension_semantics=("parallel",))

    feat_bytes = aggregate_feats.size * aggregate_feats.dtype.itemsize
    out_bytes = n * out_p * 4
    w_bytes = w_t.size * w_t.dtype.itemsize

    if gcn:
        cost = pl.CostEstimate(flops=2 * n * f_total * out_p,
                               transcendentals=0,
                               bytes_accessed=feat_bytes + w_bytes + out_bytes)
        out = pl.pallas_call(
            _sage_kernel_gcn,
            out_shape=jax.ShapeDtypeStruct((n, out_p), jnp.float32),
            grid_spec=pl.GridSpec(
                grid=grid,
                in_specs=[
                    pl.BlockSpec((tm, in_size), lambda i: (i, 0)),
                    # weight stays VMEM-resident across all grid steps
                    pl.BlockSpec((f_total, out_p), lambda i: (0, 0)),
                ],
                out_specs=pl.BlockSpec((tm, out_p), lambda i: (i, 0)),
            ),
            compiler_params=compiler_params,
            cost_estimate=cost,
        )(aggregate_feats, w_t)
    else:
        # Fuse the concat: two accumulated dots against the two weight halves.
        w_self = w_t[:in_size, :]
        w_agg = w_t[in_size:, :]
        self_bytes = self_feats.size * self_feats.dtype.itemsize
        cost = pl.CostEstimate(
            flops=2 * n * f_total * out_p,
            transcendentals=0,
            bytes_accessed=self_bytes + feat_bytes + w_bytes + out_bytes)
        out = pl.pallas_call(
            _sage_kernel_concat,
            out_shape=jax.ShapeDtypeStruct((n, out_p), jnp.float32),
            grid_spec=pl.GridSpec(
                grid=grid,
                in_specs=[
                    pl.BlockSpec((tm, in_size), lambda i: (i, 0)),
                    pl.BlockSpec((tm, in_size), lambda i: (i, 0)),
                    # both weight halves stay VMEM-resident across all steps
                    pl.BlockSpec((in_size, out_p), lambda i: (0, 0)),
                    pl.BlockSpec((in_size, out_p), lambda i: (0, 0)),
                ],
                out_specs=pl.BlockSpec((tm, out_p), lambda i: (i, 0)),
            ),
            compiler_params=compiler_params,
            cost_estimate=cost,
        )(self_feats, aggregate_feats, w_self, w_agg)

    # Slice away the lane padding; shape matches the PyTorch module output.
    return out[:, :out_size]


def xavier_uniform(key, shape, dtype=jnp.float32):
    fan_out, fan_in = shape
    limit = (6.0 / (fan_in + fan_out)) ** 0.5
    return jax.random.uniform(key, shape, dtype, minval=-limit, maxval=limit)


if __name__ == "__main__":
    input_size = 32
    out_size = 32
    n_nodes = 8

    key = jax.random.PRNGKey(0)
    k_w, k_wg, k_self, k_agg = jax.random.split(key, 4)

    self_feats = jax.random.normal(k_self, (n_nodes, input_size), jnp.float32)
    aggregate_feats = jax.random.normal(k_agg, (n_nodes, input_size), jnp.float32)

    # --- concat (gcn=False) path ---
    weight = xavier_uniform(k_w, (out_size, 2 * input_size))
    out = sage_layer(self_feats, aggregate_feats, weight, gcn=False)
    jax.block_until_ready(out)

    combined = jnp.concatenate([self_feats, aggregate_feats], axis=1)
    ref = jnp.maximum(combined @ weight.T, 0.0)
    assert out.shape == ref.shape
    assert jnp.allclose(out, ref, atol=1e-5, rtol=1e-5)

    # --- gcn=True path ---
    weight_g = xavier_uniform(k_wg, (out_size, input_size))
    out_g = sage_layer(self_feats, aggregate_feats, weight_g, gcn=True)
    jax.block_until_ready(out_g)
    ref_g = jnp.maximum(aggregate_feats @ weight_g.T, 0.0)
    assert jnp.allclose(out_g, ref_g, atol=1e-5, rtol=1e-5)

    # --- multi-block / partial-block tiling path ---
    n_big = 200
    k_s2, k_a2 = jax.random.split(jax.random.PRNGKey(1), 2)
    sf2 = jax.random.normal(k_s2, (n_big, input_size), jnp.float32)
    af2 = jax.random.normal(k_a2, (n_big, input_size), jnp.float32)
    out2 = sage_layer(sf2, af2, weight, gcn=False, block_rows=128)
    jax.block_until_ready(out2)
    ref2 = jnp.maximum(jnp.concatenate([sf2, af2], axis=1) @ weight.T, 0.0)
    assert jnp.allclose(out2, ref2, atol=1e-5, rtol=1e-5)

    print("KERNEL_OK")
</pallas_src>

<mosaic_0001>
module attributes {stable_mosaic.version = 11 : i64} {
  func.func @_sage_kernel_concat(%arg0: i32, %arg1: memref<8x32xf32, #tpu.memory_space<vmem>>, %arg2: memref<8x32xf32, #tpu.memory_space<vmem>>, %arg3: memref<32x128xf32, #tpu.memory_space<vmem>>, %arg4: memref<32x128xf32, #tpu.memory_space<vmem>>, %arg5: memref<8x128xf32, #tpu.memory_space<vmem>>) attributes {dimension_semantics = [#tpu.dimension_semantics<parallel>], iteration_bounds = array<i64: 1>, scalar_prefetch = 0 : i64, scratch_operands = 0 : i64, tpu.core_type = #tpu.core_type<tc>, window_params = [{transform_indices = @transform_0, window_bounds = array<i64: 8, 32>}, {transform_indices = @transform_1, window_bounds = array<i64: 8, 32>}, {pipeline_mode = #tpu.pipeline_mode<synchronous>, transform_indices = @transform_2, window_bounds = array<i64: 32, 128>}, {pipeline_mode = #tpu.pipeline_mode<synchronous>, transform_indices = @transform_3, window_bounds = array<i64: 32, 128>}, {transform_indices = @transform_4, window_bounds = array<i64: 8, 128>}]} {
    %c0 = arith.constant 0 : index
    %c0_0 = arith.constant 0 : index
    %0 = vector.load %arg1[%c0, %c0_0] : memref<8x32xf32, #tpu.memory_space<vmem>>, vector<8x32xf32>
    %c0_1 = arith.constant 0 : index
    %c0_2 = arith.constant 0 : index
    %1 = vector.load %arg3[%c0_1, %c0_2] : memref<32x128xf32, #tpu.memory_space<vmem>>, vector<32x128xf32>
    %cst = arith.constant dense<0.000000e+00> : vector<8x128xf32>
    %2 = tpu.matmul %0, %1, %cst {dimension_numbers = #tpu.dot_dimension_numbers<[1], [0], [0], [1], [0, 0, 1, 1], [], []>} : vector<8x32xf32>, vector<32x128xf32>, vector<8x128xf32> -> vector<8x128xf32>
    %c0_3 = arith.constant 0 : index
    %c0_4 = arith.constant 0 : index
    %3 = vector.load %arg2[%c0_3, %c0_4] : memref<8x32xf32, #tpu.memory_space<vmem>>, vector<8x32xf32>
    %c0_5 = arith.constant 0 : index
    %c0_6 = arith.constant 0 : index
    %4 = vector.load %arg4[%c0_5, %c0_6] : memref<32x128xf32, #tpu.memory_space<vmem>>, vector<32x128xf32>
    %cst_7 = arith.constant dense<0.000000e+00> : vector<8x128xf32>
    %5 = tpu.matmul %3, %4, %cst_7 {dimension_numbers = #tpu.dot_dimension_numbers<[1], [0], [0], [1], [0, 0, 1, 1], [], []>} : vector<8x32xf32>, vector<32x128xf32>, vector<8x128xf32> -> vector<8x128xf32>
    %6 = arith.addf %2, %5 : vector<8x128xf32>
    %cst_8 = arith.constant 0.000000e+00 : f32
    %7 = vector.broadcast %cst_8 : f32 to vector<8x128xf32>
    %8 = arith.maximumf %6, %7 : vector<8x128xf32>
    %c0_9 = arith.constant 0 : index
    %c0_10 = arith.constant 0 : index
    %9 = vector.load %arg5[%c0_9, %c0_10] : memref<8x128xf32, #tpu.memory_space<vmem>>, vector<8x128xf32>
    tpu.vector_store %arg5[%c0_9, %c0_10], %8 {strides = array<i32>} : memref<8x128xf32, #tpu.memory_space<vmem>>, vector<8x128xf32>,
    return
  }
  func.func @transform_0(%arg0: i32) -> (i32, i32) {
    %c0_i32 = arith.constant 0 : i32
    %c0_i32_0 = arith.constant 0 : i32
    return %arg0, %c0_i32 : i32, i32
  }
  func.func @transform_1(%arg0: i32) -> (i32, i32) {
    %c0_i32 = arith.constant 0 : i32
    %c0_i32_0 = arith.constant 0 : i32
    return %arg0, %c0_i32 : i32, i32
  }
  func.func @transform_2(%arg0: i32) -> (i32, i32) {
    %c0_i32 = arith.constant 0 : i32
    %c0_i32_0 = arith.constant 0 : i32
    %c0_i32_1 = arith.constant 0 : i32
    return %c0_i32, %c0_i32_0 : i32, i32
  }
  func.func @transform_3(%arg0: i32) -> (i32, i32) {
    %c0_i32 = arith.constant 0 : i32
    %c0_i32_0 = arith.constant 0 : i32
    %c0_i32_1 = arith.constant 0 : i32
    return %c0_i32, %c0_i32_0 : i32, i32
  }
  func.func @transform_4(%arg0: i32) -> (i32, i32) {
    %c0_i32 = arith.constant 0 : i32
    %c0_i32_0 = arith.constant 0 : i32
    return %arg0, %c0_i32 : i32, i32
  }
}

</mosaic_0001>

<llo_original>
// kernel: tpu_custom_call.1
$region0: #{tpu_custom_call.1}
  #allocation0 [shape = 'u32[]', space=smem, size = 0x4, offset = 0x4, fixed_abs, tag = 'smem constant byte address 0x4 - core index']
  #allocation1 [shape = 'u32[144,128]{1,0:T(1,128)}', space=vmem, size = 0x12000, scoped, tag = 'internal scratch']
  %s0 = inlined_call_operand.hbm [shape: f32[8,32], index: 0, kind: input, shape index: {}]
  %s1 = inlined_call_operand.hbm [shape: f32[8,32], index: 1, kind: input, shape index: {}]
  %s2 = inlined_call_operand.hbm [shape: f32[32,128], index: 2, kind: input, shape index: {}]
  %s3 = inlined_call_operand.hbm [shape: f32[32,128], index: 3, kind: input, shape index: {}]
  %s4 = inlined_call_operand.hbm [shape: f32[8,128], index: 4, kind: output, shape index: {}]
  %s5 = sld [smem:[#allocation0]]
  $region42: #{tpu_custom_call.1} parent=0
    _
  %s7 = ssub.s32 1, %s5
  %s8 = scalar_select 0, %s7, %s5
  $region1: #{tpu_custom_call.1} parent=0
    #allocation2 [shape = 'u8[4096]{0}', space=vmem, size = 0x1000, scoped, tag = 'input window, operand 0, single buffered']
    #allocation3 [shape = 's32[1]{0}', space=sflag, size = 0x4, scoped, tag = 'scoped memory for tpu_custom_call.1']
    #allocation4 [shape = 's32[1]{0}', space=sflag, size = 0x4, scoped, tag = 'scoped memory for tpu_custom_call.1']
    #allocation5 [shape = 'u8[4096]{0}', space=vmem, size = 0x1000, scoped, tag = 'input window, operand 1, single buffered']
    #allocation6 [shape = 's32[1]{0}', space=sflag, size = 0x4, scoped, tag = 'scoped memory for tpu_custom_call.1']
    #allocation7 [shape = 'u8[16384]{0}', space=vmem, size = 0x4000, scoped, tag = 'input window, operand 2, single buffered']
    #allocation8 [shape = 'u8[16384]{0}', space=vmem, size = 0x4000, scoped, tag = 'input window, operand 3, single buffered']
    #allocation9 [shape = 's32[1]{0}', space=sflag, size = 0x4, scoped, tag = 'scoped memory for tpu_custom_call.1']
    #allocation10 [shape = 'u8[4096]{0}', space=vmem, size = 0x1000, scoped, tag = 'output window, operand 0, single buffered']
    %9 = vsyncpa [#allocation3], 0
    %10 = vsyncpa [#allocation6], 0
    %11 = vsyncpa [#allocation9], 0
    %12 = vsyncpa [#allocation4], 0
    // Predicated region
    $region2: #{tpu_custom_call.1} parent=1 // pred_check
      _
    $region3: #{tpu_custom_call.1} parent=1 // pred_check_branch
      %14 = sbr.rel (0) target = $region5
    $region4: #{tpu_custom_call.1} parent=1 // pred_region
      %s16 = ssub.s32 128, 128
      %17 = vsyncadd [#allocation3], %s16
      %s19 = sshll.u32 [#allocation2], 4
      %s20 = int_to_ptr.vmem [resolvable:$true] %s19
      %22 = dma.hbm_to_vmem [thread:$0]  %s0, 128, %s20, [#allocation3]
    $region5: #{tpu_custom_call.1} parent=1 // pred_fallthru
      _
    // Predicated region
    $region6: #{tpu_custom_call.1} parent=1 // pred_check
      _
    $region7: #{tpu_custom_call.1} parent=1 // pred_check_branch
      %24 = sbr.rel (0) target = $region9
    $region8: #{tpu_custom_call.1} parent=1 // pred_region
      %s26 = ssub.s32 128, 128
      %27 = vsyncadd [#allocation6], %s26
      %s29 = sshll.u32 [#allocation5], 4
      %s30 = int_to_ptr.vmem [resolvable:$true] %s29
      %32 = dma.hbm_to_vmem [thread:$0]  %s1, 128, %s30, [#allocation6]
    $region9: #{tpu_custom_call.1} parent=1 // pred_fallthru
      _
    // Predicated region
    $region10: #{tpu_custom_call.1} parent=1 // pred_check
      _
    $region11: #{tpu_custom_call.1} parent=1 // pred_check_branch
      %34 = sbr.rel (0) target = $region13
    $region12: #{tpu_custom_call.1} parent=1 // pred_region
      %s36 = ssub.s32 512, 512
      %37 = vsyncadd [#allocation6], %s36
      %s38 = sshll.u32 [#allocation7], 4
      %s39 = int_to_ptr.vmem [resolvable:$true] %s38
      %44 = dma.hbm_to_vmem [thread:$0]  %s2, 512, %s39, [#allocation6], 128, 128, 8
    $region13: #{tpu_custom_call.1} parent=1 // pred_fallthru
      _
    // Predicated region
    $region14: #{tpu_custom_call.1} parent=1 // pred_check
      _
    $region15: #{tpu_custom_call.1} parent=1 // pred_check_branch
      %46 = sbr.rel (0) target = $region17
    $region16: #{tpu_custom_call.1} parent=1 // pred_region
      %s48 = ssub.s32 512, 512
      %49 = vsyncadd [#allocation9], %s48
      %s50 = sshll.u32 [#allocation8], 4
      %s51 = int_to_ptr.vmem [resolvable:$true] %s50
      %56 = dma.hbm_to_vmem [thread:$0]  %s3, 512, %s51, [#allocation9], 128, 128, 8
    $region17: #{tpu_custom_call.1} parent=1 // pred_fallthru
      _
    // Predicated region
    $region18: #{tpu_custom_call.1} parent=1 // pred_check
      _
    $region19: #{tpu_custom_call.1} parent=1 // pred_check_branch
      %58 = sbr.rel (0) target = $region21
    $region20: #{tpu_custom_call.1} parent=1 // pred_region
      %59 = dma.done [#allocation3], 128
    $region21: #{tpu_custom_call.1} parent=1 // pred_fallthru
      _
    // Predicated region
    $region22: #{tpu_custom_call.1} parent=1 // pred_check
      _
    $region23: #{tpu_custom_call.1} parent=1 // pred_check_branch
      %61 = sbr.rel (0) target = $region25
    $region24: #{tpu_custom_call.1} parent=1 // pred_region
      %62 = dma.done [#allocation6], 128
    $region25: #{tpu_custom_call.1} parent=1 // pred_fallthru
      _
    // Predicated region
    $region26: #{tpu_custom_call.1} parent=1 // pred_check
      _
    $region27: #{tpu_custom_call.1} parent=1 // pred_check_branch
      %64 = sbr.rel (0) target = $region29
    $region28: #{tpu_custom_call.1} parent=1 // pred_region
      %65 = dma.done [#allocation6], 512
    $region29: #{tpu_custom_call.1} parent=1 // pred_fallthru
      _
    // Predicated region
    $region30: #{tpu_custom_call.1} parent=1 // pred_check
      _
    $region31: #{tpu_custom_call.1} parent=1 // pred_check_branch
      %67 = sbr.rel (0) target = $region33
    $region32: #{tpu_custom_call.1} parent=1 // pred_region
      %68 = dma.done [#allocation9], 512
    $region33: #{tpu_custom_call.1} parent=1 // pred_fallthru
      _
    %v69 = vld [vmem:[#allocation2] sm:$0xff]
    %v70 = vld [vmem:[#allocation7] sm:$0xff]
    %v71 = vld [vmem:[#allocation7 + $0x8] sm:$0xff]
    %v72 = vld [vmem:[#allocation7 + $0x10] sm:$0xff]
    %v73 = vld [vmem:[#allocation7 + $0x18] sm:$0xff]
    %v74 = vld [vmem:[#allocation5] sm:$0xff]
    %v75 = vld [vmem:[#allocation8] sm:$0xff]
    %v76 = vld [vmem:[#allocation8 + $0x8] sm:$0xff]
    %v77 = vld [vmem:[#allocation8 + $0x10] sm:$0xff]
    %v78 = vld [vmem:[#allocation8 + $0x18] sm:$0xff]
    %vm79 = vcmask 261120
    %v81 = vsel %vm79, %v74, 0
    %83 = vmatprep.subr.mxu0 0.0
    %84 = vmatpush1.msra.mxu0 0.0
    %85 = vmatprep.subr.mxu0 0.0
    %86 = vmatpush1.msra.mxu0 0.0
    %87 = vmatprep.subr.mxu0 0.0
    %88 = vmatpush1.msra.mxu0 0.0
    %89 = vmatprep.subr.mxu0 0.0
    %90 = vmatpush1.msra.mxu0 0.0
    %91 = vmatprep.subr.mxu0 0.0
    %92 = vmatpush1.msra.mxu0 0.0
    %93 = vmatprep.subr.mxu0 0.0
    %94 = vmatpush1.msra.mxu0 0.0
    %95 = vmatprep.subr.mxu0 0.0
    %96 = vmatpush1.msra.mxu0 0.0
    %97 = vmatprep.subr.mxu0 0.0
    %98 = vmatpush1.msra.mxu0 0.0
    %99 = vmatprep.subr.mxu0 0.0
    %100 = vmatpush1.msra.mxu0 0.0
    %101 = vmatprep.subr.mxu0 0.0
    %102 = vmatpush1.msra.mxu0 0.0
    %103 = vmatprep.subr.mxu0 0.0
    %104 = vmatpush1.msra.mxu0 0.0
    %105 = vmatprep.subr.mxu0 0.0
    %106 = vmatpush1.msra.mxu0 0.0
    %107 = vmatprep.subr.mxu0 0.0
    %108 = vmatpush1.msra.mxu0 %v78
    %109 = vmatprep.subr.mxu0 0.0
    %110 = vmatpush1.msra.mxu0 %v77
    %111 = vmatprep.subr.mxu0 0.0
    %112 = vmatpush1.msra.mxu0 %v76
    %113 = vmatprep.subr.mxu0 0.0
    %114 = vmatpush1.msra.mxu0 %v75
    %115 = vmatprep.subr.mxu0 0.0
    %116 = vmatpush2.msra.mxu0 0.0
    %117 = vmatprep.subr.mxu0 0.0
    %118 = vmatpush2.msra.mxu0 0.0
    %119 = vmatprep.subr.mxu0 0.0
    %120 = vmatpush2.msra.mxu0 0.0
    %121 = vmatprep.subr.mxu0 0.0
    %122 = vmatpush2.msra.mxu0 0.0
    %123 = vmatprep.subr.mxu0 0.0
    %124 = vmatpush2.msra.mxu0 0.0
    %125 = vmatprep.subr.mxu0 0.0
    %126 = vmatpush2.msra.mxu0 0.0
    %127 = vmatprep.subr.mxu0 0.0
    %128 = vmatpush2.msra.mxu0 0.0
    %129 = vmatprep.subr.mxu0 0.0
    %130 = vmatpush2.msra.mxu0 0.0
    %131 = vmatprep.subr.mxu0 0.0
    %132 = vmatpush2.msra.mxu0 0.0
    %133 = vmatprep.subr.mxu0 0.0
    %134 = vmatpush2.msra.mxu0 0.0
    %135 = vmatprep.subr.mxu0 0.0
    %136 = vmatpush2.msra.mxu0 0.0
    %137 = vmatprep.subr.mxu0 0.0
    %138 = vmatpush2.msra.mxu0 0.0
    %139 = vmatprep.subr.mxu0 0.0
    %140 = vmatpush2.msra.mxu0 0.0
    %141 = vmatprep.subr.mxu0 0.0
    %142 = vmatpush2.msra.mxu0 0.0
    %143 = vmatprep.subr.mxu0 0.0
    %144 = vmatpush2.msra.mxu0 0.0
    %145 = vmatprep.subr.mxu0 0.0
    %146 = vmatpush2.msra.mxu0 0.0
    %147 = vmatprep.mubr.f32.mxu0 0.0
    %148 = vmatmul.mubr.f32.gmra.mxu0 %v81
    %v149 = vpop.f32.mrf.mxu0
    %v150 = vadd.f32 0.0, %v149
    %v151 = vpop.f32.mrf.mxu0
    %152 = vdwg.mxu0
    %v154 = vsel %vm79, %v69, 0
    %156 = vmatprep.subr.mxu0 0.0
    %157 = vmatpush1.msra.mxu0 0.0
    %158 = vmatprep.subr.mxu0 0.0
    %159 = vmatpush1.msra.mxu0 0.0
    %160 = vmatprep.subr.mxu0 0.0
    %161 = vmatpush1.msra.mxu0 0.0
    %162 = vmatprep.subr.mxu0 0.0
    %163 = vmatpush1.msra.mxu0 0.0
    %164 = vmatprep.subr.mxu0 0.0
    %165 = vmatpush1.msra.mxu0 0.0
    %166 = vmatprep.subr.mxu0 0.0
    %167 = vmatpush1.msra.mxu0 0.0
    %168 = vmatprep.subr.mxu0 0.0
    %169 = vmatpush1.msra.mxu0 0.0
    %170 = vmatprep.subr.mxu0 0.0
    %171 = vmatpush1.msra.mxu0 0.0
    %172 = vmatprep.subr.mxu0 0.0
    %173 = vmatpush1.msra.mxu0 0.0
    %174 = vmatprep.subr.mxu0 0.0
    %175 = vmatpush1.msra.mxu0 0.0
    %176 = vmatprep.subr.mxu0 0.0
    %177 = vmatpush1.msra.mxu0 0.0
    %178 = vmatprep.subr.mxu0 0.0
    %179 = vmatpush1.msra.mxu0 0.0
    %180 = vmatprep.subr.mxu0 0.0
    %181 = vmatpush1.msra.mxu0 %v73
    %182 = vmatprep.subr.mxu0 0.0
    %183 = vmatpush1.msra.mxu0 %v72
    %184 = vmatprep.subr.mxu0 0.0
    %185 = vmatpush1.msra.mxu0 %v71
    %186 = vmatprep.subr.mxu0 0.0
    %187 = vmatpush1.msra.mxu0 %v70
    %188 = vmatprep.subr.mxu0 0.0
    %189 = vmatpush2.msra.mxu0 0.0
    %190 = vmatprep.subr.mxu0 0.0
    %191 = vmatpush2.msra.mxu0 0.0
    %192 = vmatprep.subr.mxu0 0.0
    %193 = vmatpush2.msra.mxu0 0.0
    %194 = vmatprep.subr.mxu0 0.0
    %195 = vmatpush2.msra.mxu0 0.0
    %196 = vmatprep.subr.mxu0 0.0
    %197 = vmatpush2.msra.mxu0 0.0
    %198 = vmatprep.subr.mxu0 0.0
    %199 = vmatpush2.msra.mxu0 0.0
    %200 = vmatprep.subr.mxu0 0.0
    %201 = vmatpush2.msra.mxu0 0.0
    %202 = vmatprep.subr.mxu0 0.0
    %203 = vmatpush2.msra.mxu0 0.0
    %204 = vmatprep.subr.mxu0 0.0
    %205 = vmatpush2.msra.mxu0 0.0
    %206 = vmatprep.subr.mxu0 0.0
    %207 = vmatpush2.msra.mxu0 0.0
    %208 = vmatprep.subr.mxu0 0.0
    %209 = vmatpush2.msra.mxu0 0.0
    %210 = vmatprep.subr.mxu0 0.0
    %211 = vmatpush2.msra.mxu0 0.0
    %212 = vmatprep.subr.mxu0 0.0
    %213 = vmatpush2.msra.mxu0 0.0
    %214 = vmatprep.subr.mxu0 0.0
    %215 = vmatpush2.msra.mxu0 0.0
    %216 = vmatprep.subr.mxu0 0.0
    %217 = vmatpush2.msra.mxu0 0.0
    %218 = vmatprep.subr.mxu0 0.0
    %219 = vmatpush2.msra.mxu0 0.0
    %220 = vmatprep.mubr.f32.mxu0 0.0
    %221 = vmatmul.mubr.f32.gmra.mxu0 %v154
    %v222 = vpop.f32.mrf.mxu0
    %v223 = vadd.f32 %v150, %v222
    %v224 = vpop.f32.mrf.mxu0
    %225 = vdwg.mxu0
    %v226 = vmax.f32 %v223, 0.0
    %227 = vst [vmem:[#allocation10] sm:$0xff] %v226
    // Predicated region
    $region34: #{tpu_custom_call.1} parent=1 // pred_check
      _
    $region35: #{tpu_custom_call.1} parent=1 // pred_check_branch
      %229 = sbr.rel (0) target = $region37
    $region36: #{tpu_custom_call.1} parent=1 // pred_region
      %s231 = ssub.s32 128, 128
      %232 = vsyncadd [#allocation4], %s231
      %s234 = sshll.u32 [#allocation10], 4
      %s235 = int_to_ptr.vmem [resolvable:$true] %s234
      %237 = dma.vmem_to_hbm [thread:$0]  %s235, 128, %s4, [#allocation4]
    $region37: #{tpu_custom_call.1} parent=1 // pred_fallthru
      _
    // Predicated region
    $region38: #{tpu_custom_call.1} parent=1 // pred_check
      _
    $region39: #{tpu_custom_call.1} parent=1 // pred_check_branch
      %239 = sbr.rel (0) target = $region41
    $region40: #{tpu_custom_call.1} parent=1 // pred_region
      %240 = dma.done [#allocation4], 128
    $region41: #{tpu_custom_call.1} parent=1 // pred_fallthru
      _
    %241 = vsyncpa [#allocation3], 1
    %242 = vsyncpa [#allocation6], 1
    %243 = vsyncpa [#allocation9], 1
    %244 = vsyncpa [#allocation4], 1

</llo_original>
